<compile_context>
chip_gen: v7x
topology: tpu7x:2x2x1
jax: 0.10.0
libtpu: 0.0.40
codegen_flags: <defaults>
</compile_context>

<pallas_src>
import jax
import jax.numpy as jnp
from jax.experimental import pallas as pl
from jax.experimental.pallas import tpu as pltpu


def _round_up(x, m):
    return ((x + m - 1) // m) * m


def tokenizer_kernel(x_ref, w_ref, add_ref, out_ref):
    # x_ref:   (Bblk, Ppad, Dpad) bf16  zero cls row + zero pad rows included
    # w_ref:   (Dpad, Epad)       bf16  projection weight, stored (in, out) = W^T
    # add_ref: (Ppad, Epad)       f32   fused bias + cls token + pos (pad rows zero)
    # out_ref: (Bblk, Ppad, Epad) f32
    bblk, ppad, dpad = x_ref.shape
    epad = w_ref.shape[1]
    # Layout-free flatten (Ppad % 8 == 0, Dpad % 128 == 0) -> one big MXU matmul.
    x = x_ref[...].reshape(bblk * ppad, dpad)
    y = jnp.dot(x, w_ref[...], preferred_element_type=jnp.float32)
    # VPU add of the fused addend table, broadcast over the batch block.
    y = y.reshape(bblk, ppad, epad) + add_ref[...]
    out_ref[...] = y.astype(out_ref.dtype)


def image_tokenizer(images, params, patch_size, *,
                    compute_dtype=jnp.bfloat16,
                    out_dtype=jnp.float32,
                    vmem_budget_bytes=40 * 1024 * 1024):
    """images: (B, C, H, W) float32.  Returns (B, num_patches + 1, E)."""
    B, C, H, W = images.shape
    ph = pw = patch_size
    assert H == W and H % ph == 0, "Images must be square and patch-divisible"
    h, w = H // ph, W // pw
    P = h * w
    D = C * ph * pw
    E = params["w"].shape[1]
    S = P + 1                                  # sequence length incl. cls slot
    assert params["pos"].shape[0] == S

    Ppad = _round_up(S, 8)
    Dpad = _round_up(D, 128)
    Epad = _round_up(E, 128)

    # --- patch extraction + cls zero row + (8,128) pad + bf16 cast: one pass ---
    patches = images.reshape(B, C, h, ph, w, pw)
    patches = patches.transpose(0, 2, 4, 1, 3, 5).reshape(B, P, D)
    x = jnp.pad(patches, ((0, 0), (1, Ppad - S), (0, Dpad - D)))
    x = x.astype(compute_dtype)                                    # (B, Ppad, Dpad)

    # --- weight padded with zero rows/cols (zeros contribute nothing) ---
    w_p = jnp.pad(params["w"], ((0, Dpad - D), (0, Epad - E))).astype(compute_dtype)

    # --- fold Linear bias + cls token + position embedding into one table ---
    addend = params["pos"] + jnp.concatenate(
        [params["cls"][0], jnp.broadcast_to(params["b"], (P, E))], axis=0)
    addend = jnp.pad(addend, ((0, Ppad - S), (0, Epad - E))).astype(jnp.float32)

    # --- Bblk: largest divisor of B fitting VMEM, keeping >= 2 grid steps ---
    csz = jnp.dtype(compute_dtype).itemsize
    osz = jnp.dtype(out_dtype).itemsize
    const_bytes = Dpad * Epad * csz + Ppad * Epad * 4      # resident weight + addend

    def tile_bytes(bblk):
        x_t = bblk * Ppad * Dpad * csz
        o_t = bblk * Ppad * Epad * osz
        return 2 * (x_t + o_t) + 2 * const_bytes           # double-buffered pipeline

    bblk = 1
    for cand in range(1, B + 1):
        if B % cand:
            continue
        if tile_bytes(cand) > vmem_budget_bytes:
            continue
        if B // cand < 2 and B >= 2:                        # keep both v7x TCs busy
            continue
        bblk = cand
    grid = (B // bblk,)

    vmem_limit = int(min(max(tile_bytes(bblk) + (8 << 20), 32 << 20), 48 << 20))

    cost = pl.CostEstimate(
        flops=2 * B * Ppad * Dpad * Epad,
        transcendentals=0,
        bytes_accessed=(B * Ppad * Dpad * csz            # x read
                        + Dpad * Epad * csz               # weight read
                        + Ppad * Epad * 4                 # addend read
                        + B * Ppad * Epad * osz),         # output write
    )

    out = pl.pallas_call(
        tokenizer_kernel,
        out_shape=jax.ShapeDtypeStruct((B, Ppad, Epad), out_dtype),
        grid=grid,
        in_specs=[
            pl.BlockSpec((bblk, Ppad, Dpad), lambda i: (i, 0, 0)),  # per-step batch slab
            pl.BlockSpec((Dpad, Epad), lambda i: (0, 0)),           # resident weight
            pl.BlockSpec((Ppad, Epad), lambda i: (0, 0)),           # resident addend
        ],
        out_specs=pl.BlockSpec((bblk, Ppad, Epad), lambda i: (i, 0, 0)),
        compiler_params=pltpu.CompilerParams(
            dimension_semantics=("parallel",),
            vmem_limit_bytes=vmem_limit),
        cost_estimate=cost,
    )(x, w_p, addend)

    # Slice the pad off (skipped entirely when shapes are already aligned).
    if Ppad != S or Epad != E:
        out = out[:, :S, :E]
    return out


def ref_forward(images, params, patch_size, compute_dtype=jnp.float32):
    """Pure-JAX reference mirroring the PyTorch forward."""
    B, C, H, W = images.shape
    ph = pw = patch_size
    h, w = H // ph, W // pw
    E = params["w"].shape[1]
    # torch: unfold(2,ph,ph).unfold(3,pw,pw).permute(0,2,3,1,4,5).reshape(...)
    patches = images.reshape(B, C, h, ph, w, pw).transpose(0, 2, 4, 1, 3, 5)
    patches = patches.reshape(B, h * w, C * ph * pw)
    x = jnp.dot(patches.astype(compute_dtype), params["w"].astype(compute_dtype),
                preferred_element_type=jnp.float32) + params["b"][0]
    cls = jnp.broadcast_to(params["cls"], (B, 1, E))
    x = jnp.concatenate([cls, x], axis=1)
    return x + params["pos"]


def make_params(key, in_channels, patch_size, img_size, embed_size):
    P = (img_size // patch_size) ** 2
    D = in_channels * patch_size * patch_size
    E = embed_size
    kw, kb, kp, kc = jax.random.split(key, 4)
    s = 0.1
    return {
        # projection stored as (in, out) = W^T of PyTorch's (out, in) layout
        "w": jax.random.normal(kw, (D, E), jnp.float32) * s,
        "b": jax.random.normal(kb, (1, E), jnp.float32) * s,
        "pos": jax.random.normal(kp, (P + 1, E), jnp.float32),
        "cls": jax.random.normal(kc, (1, 1, E), jnp.float32),
    }


if __name__ == "__main__":
    # Small shapes: batch=2, in_channels=4, img_size=16, patch_size=4, embed=32
    # -> num_patches = 16, patch_dim = 64, output (2, 17, 32).
    B, C, IMG, PATCH, E = 2, 4, 16, 4, 32

    root = jax.random.PRNGKey(0)
    ki, kp = jax.random.split(root)
    images = jax.random.normal(ki, (B, C, IMG, IMG), jnp.float32)
    params = make_params(kp, C, PATCH, IMG, E)

    tokenizer = jax.jit(image_tokenizer, static_argnums=2)
    out = jax.block_until_ready(tokenizer(images, params, PATCH))

    S = (IMG // PATCH) ** 2 + 1
    assert out.shape == (B, S, E), out.shape

    # Apples-to-apples reference (bf16 operands, f32 accumulate) — tight check.
    ref_b = jax.block_until_ready(ref_forward(images, params, PATCH, jnp.bfloat16))
    err_b = float(jnp.max(jnp.abs(out - ref_b)))
    assert err_b < 1e-3, f"bf16-matched max abs err {err_b}"

    # Full-f32 reference (exact PyTorch semantics) — loose check, since the
    # kernel deliberately rounds matmul operands to bf16 per the perf review.
    ref_f = jax.block_until_ready(ref_forward(images, params, PATCH, jnp.float32))
    err_f = float(jnp.max(jnp.abs(out - ref_f)))
    assert err_f < 5e-2, f"f32 max abs err {err_f}"

    print("KERNEL_OK")
</pallas_src>

<mosaic_0001>
module attributes {stable_mosaic.version = 11 : i64} {
  func.func @tokenizer_kernel(%arg0: i32, %arg1: memref<1x24x128xbf16, #tpu.memory_space<vmem>>, %arg2: memref<128x128xbf16, #tpu.memory_space<vmem>>, %arg3: memref<24x128xf32, #tpu.memory_space<vmem>>, %arg4: memref<1x24x128xf32, #tpu.memory_space<vmem>>) attributes {dimension_semantics = [#tpu.dimension_semantics<parallel>], iteration_bounds = array<i64: 2>, scalar_prefetch = 0 : i64, scratch_operands = 0 : i64, tpu.core_type = #tpu.core_type<tc>, window_params = [{transform_indices = @transform_0, window_bounds = array<i64: 1, 24, 128>}, {pipeline_mode = #tpu.pipeline_mode<synchronous>, transform_indices = @transform_1, window_bounds = array<i64: 128, 128>}, {pipeline_mode = #tpu.pipeline_mode<synchronous>, transform_indices = @transform_2, window_bounds = array<i64: 24, 128>}, {transform_indices = @transform_3, window_bounds = array<i64: 1, 24, 128>}]} {
    %c0 = arith.constant 0 : index
    %c0_0 = arith.constant 0 : index
    %c0_1 = arith.constant 0 : index
    %0 = vector.load %arg1[%c0, %c0_0, %c0_1] : memref<1x24x128xbf16, #tpu.memory_space<vmem>>, vector<1x24x128xbf16>
    %1 = vector.shape_cast %0 : vector<1x24x128xbf16> to vector<24x128xbf16>
    %c0_2 = arith.constant 0 : index
    %c0_3 = arith.constant 0 : index
    %2 = vector.load %arg2[%c0_2, %c0_3] : memref<128x128xbf16, #tpu.memory_space<vmem>>, vector<128x128xbf16>
    %cst = arith.constant dense<0.000000e+00> : vector<24x128xf32>
    %3 = tpu.matmul %1, %2, %cst {dimension_numbers = #tpu.dot_dimension_numbers<[1], [0], [0], [1], [0, 0, 1, 1], [], []>} : vector<24x128xbf16>, vector<128x128xbf16>, vector<24x128xf32> -> vector<24x128xf32>
    %4 = vector.shape_cast %3 : vector<24x128xf32> to vector<1x24x128xf32>
    %c0_4 = arith.constant 0 : index
    %c0_5 = arith.constant 0 : index
    %5 = vector.load %arg3[%c0_4, %c0_5] : memref<24x128xf32, #tpu.memory_space<vmem>>, vector<24x128xf32>
    %6 = vector.shape_cast %5 : vector<24x128xf32> to vector<1x24x128xf32>
    %7 = arith.addf %4, %6 : vector<1x24x128xf32>
    %c0_6 = arith.constant 0 : index
    %c0_7 = arith.constant 0 : index
    %c0_8 = arith.constant 0 : index
    %8 = vector.load %arg4[%c0_6, %c0_7, %c0_8] : memref<1x24x128xf32, #tpu.memory_space<vmem>>, vector<1x24x128xf32>
    tpu.vector_store %arg4[%c0_6, %c0_7, %c0_8], %7 {strides = array<i32>} : memref<1x24x128xf32, #tpu.memory_space<vmem>>, vector<1x24x128xf32>,
    return
  }
  func.func @transform_0(%arg0: i32) -> (i32, i32, i32) {
    %c0_i32 = arith.constant 0 : i32
    %c0_i32_0 = arith.constant 0 : i32
    %c0_i32_1 = arith.constant 0 : i32
    return %arg0, %c0_i32, %c0_i32_0 : i32, i32, i32
  }
  func.func @transform_1(%arg0: i32) -> (i32, i32) {
    %c0_i32 = arith.constant 0 : i32
    %c0_i32_0 = arith.constant 0 : i32
    %c0_i32_1 = arith.constant 0 : i32
    return %c0_i32, %c0_i32_0 : i32, i32
  }
  func.func @transform_2(%arg0: i32) -> (i32, i32) {
    %c0_i32 = arith.constant 0 : i32
    %c0_i32_0 = arith.constant 0 : i32
    %c0_i32_1 = arith.constant 0 : i32
    return %c0_i32, %c0_i32_0 : i32, i32
  }
  func.func @transform_3(%arg0: i32) -> (i32, i32, i32) {
    %c0_i32 = arith.constant 0 : i32
    %c0_i32_0 = arith.constant 0 : i32
    %c0_i32_1 = arith.constant 0 : i32
    return %arg0, %c0_i32, %c0_i32_0 : i32, i32, i32
  }
}

</mosaic_0001>

<llo_original>
// kernel: image_tokenizer.1
$region0: #{image_tokenizer.1}
  #allocation0 [shape = 'u32[]', space=smem, size = 0x4, offset = 0x4, fixed_abs, tag = 'smem constant byte address 0x4 - core index']
  #allocation1 [shape = 'u32[144,128]{1,0:T(1,128)}', space=vmem, size = 0x12000, scoped, tag = 'internal scratch']
  %s0 = inlined_call_operand.vmem [shape: bf16[2,24,128], index: 0, kind: input, shape index: {}]
  %s1 = inlined_call_operand.vmem [shape: bf16[128,128], index: 1, kind: input, shape index: {}]
  %s2 = inlined_call_operand.vmem [shape: f32[24,128], index: 2, kind: input, shape index: {}]
  %s3 = inlined_call_operand.vmem [shape: f32[2,24,128], index: 3, kind: output, shape index: {}]
  %s4 = sld [smem:[#allocation0]]
  $region45: #{image_tokenizer.1} parent=0
    _
  %s6 = ssub.s32 1, %s4
  %s7 = scalar_select 0, %s6, %s4
  loop: start=0, step=1, limit=4
  $region2: #{image_tokenizer.1} parent=0 // loop_pre_header
    _
  $region3: #{image_tokenizer.1} parent=0 // loop_header
    %s9 = sphi 0, %s13
    %p10 = scmp.ge.s32.totalorder %s9, 4
    %s19 = sphi 0, %s21
    %s22 = sphi 0, %s19
    %s23 = sphi 0, %s22
    %s39 = sphi 0, %s23
    %s43 = sphi 0, %s43
    %s45 = sphi 0, %s43
    %s46 = sphi 0, %s45
    %s60 = sphi 0, %s46
    %s64 = sphi 0, %s64
    %s66 = sphi 0, %s64
    %s67 = sphi 0, %s66
    %s81 = sphi 0, %s67
    %s87 = sphi 0, %s89
    %s90 = sphi 0, %s87
    %s91 = sphi 0, %s90
    %s107 = sphi 0, %s91
  $region4: #{image_tokenizer.1} parent=0 // loop_header_branch
    %12 = sbr.rel (%p10) target = $region8
  $region5: #{image_tokenizer.1} parent=0 // loop_body
    %s14 = ssub.s32 %s9, 1
    %s15 = ssub.s32 %s9, 2
    %s16 = sadd.s32 %s9, 1
    %s17 = ssub.s32 %s9, %s16
    %p18 = scmp.eq.s32.totalorder %s17, 0
    %s20 = sadd.s32 %s19, 1
    %s21 = scalar_select %p18, %s19, %s20
    %p24 = pneg %p18
    %p25 = scmp.eq.s32.totalorder %s9, 1
    %p26 = por %p24, %p25
    %p27 = scmp.ne.s32.totalorder %s19, %s22
    %p28 = scmp.eq.s32.totalorder %s9, 0
    %p29 = por %p27, %p28
    %p30 = scmp.ne.s32.totalorder %s19, %s22
    %p31 = scmp.eq.s32.totalorder %s14, 1
    %p32 = por %p30, %p31
    %p33 = scmp.ne.s32.totalorder %s22, %s23
    %p34 = scmp.eq.s32.totalorder %s14, 0
    %p35 = por %p33, %p34
    %p36 = scmp.ne.s32.totalorder %s22, %s23
    %p37 = scmp.eq.s32.totalorder %s15, 1
    %p38 = por %p36, %p37
    %p40 = scmp.ne.s32.totalorder %s23, %s39
    %p41 = scmp.eq.s32.totalorder %s15, 0
    %p42 = por %p40, %p41
    %s44 = sadd.s32 %s43, 1
    %p47 = scmp.eq.s32.totalorder %s9, 1
    %p48 = scmp.ne.s32.totalorder %s43, %s45
    %p49 = scmp.eq.s32.totalorder %s9, 0
    %p50 = por %p48, %p49
    %p51 = scmp.ne.s32.totalorder %s43, %s45
    %p52 = scmp.eq.s32.totalorder %s14, 1
    %p53 = por %p51, %p52
    %p54 = scmp.ne.s32.totalorder %s45, %s46
    %p55 = scmp.eq.s32.totalorder %s14, 0
    %p56 = por %p54, %p55
    %p57 = scmp.ne.s32.totalorder %s45, %s46
    %p58 = scmp.eq.s32.totalorder %s15, 1
    %p59 = por %p57, %p58
    %p61 = scmp.ne.s32.totalorder %s46, %s60
    %p62 = scmp.eq.s32.totalorder %s15, 0
    %p63 = por %p61, %p62
    %s65 = sadd.s32 %s64, 1
    %p68 = scmp.eq.s32.totalorder %s9, 1
    %p69 = scmp.ne.s32.totalorder %s64, %s66
    %p70 = scmp.eq.s32.totalorder %s9, 0
    %p71 = por %p69, %p70
    %p72 = scmp.ne.s32.totalorder %s64, %s66
    %p73 = scmp.eq.s32.totalorder %s14, 1
    %p74 = por %p72, %p73
    %p75 = scmp.ne.s32.totalorder %s66, %s67
    %p76 = scmp.eq.s32.totalorder %s14, 0
    %p77 = por %p75, %p76
    %p78 = scmp.ne.s32.totalorder %s66, %s67
    %p79 = scmp.eq.s32.totalorder %s15, 1
    %p80 = por %p78, %p79
    %p82 = scmp.ne.s32.totalorder %s67, %s81
    %p83 = scmp.eq.s32.totalorder %s15, 0
    %p84 = por %p82, %p83
    %s85 = ssub.s32 %s9, %s16
    %p86 = scmp.eq.s32.totalorder %s85, 0
    %s88 = sadd.s32 %s87, 1
    %s89 = scalar_select %p86, %s87, %s88
    %p92 = pneg %p86
    %p93 = scmp.eq.s32.totalorder %s9, 1
    %p94 = por %p92, %p93
    %p95 = scmp.ne.s32.totalorder %s87, %s90
    %p96 = scmp.eq.s32.totalorder %s9, 0
    %p97 = por %p95, %p96
    %p98 = scmp.ne.s32.totalorder %s87, %s90
    %p99 = scmp.eq.s32.totalorder %s14, 1
    %p100 = por %p98, %p99
    %p101 = scmp.ne.s32.totalorder %s90, %s91
    %p102 = scmp.eq.s32.totalorder %s14, 0
    %p103 = por %p101, %p102
    %p104 = scmp.ne.s32.totalorder %s90, %s91
    %p105 = scmp.eq.s32.totalorder %s15, 1
    %p106 = por %p104, %p105
    %p108 = scmp.ne.s32.totalorder %s91, %s107
    %p109 = scmp.eq.s32.totalorder %s15, 0
    %p110 = por %p108, %p109
    %p111 = scmp.le.s32.totalorder 1, %s9
    %p112 = scmp.lt.s32.totalorder %s9, 3
    %p113 = pnand %p111, %p112
    %p114 = pneg %p113
    // Predicated region
    $region9: #{image_tokenizer.1} parent=5 // pred_check
      _
    $region10: #{image_tokenizer.1} parent=5 // pred_check_branch
      %116 = sbr.rel (%p113) target = $region12
    $region11: #{image_tokenizer.1} parent=5 // pred_region
      %s117 = ssub.s32 %s9, 1
      // Predicated region
      $region13: #{image_tokenizer.1} parent=11 // pred_check
        %p118 = pneg %p56
      $region14: #{image_tokenizer.1} parent=11 // pred_check_branch
        %120 = sbr.rel (%p118) target = $region16
      $region15: #{image_tokenizer.1} parent=11 // pred_region
        _
      $region16: #{image_tokenizer.1} parent=11 // pred_fallthru
        _
      // Predicated region
      $region17: #{image_tokenizer.1} parent=11 // pred_check
        %p121 = pneg %p77
      $region18: #{image_tokenizer.1} parent=11 // pred_check_branch
        %123 = sbr.rel (%p121) target = $region20
      $region19: #{image_tokenizer.1} parent=11 // pred_region
        _
      $region20: #{image_tokenizer.1} parent=11 // pred_fallthru
        _
    $region12: #{image_tokenizer.1} parent=5 // pred_fallthru
      _
    %p124 = scmp.lt.s32.totalorder %s9, 2
    // Predicated region
    $region21: #{image_tokenizer.1} parent=5 // pred_check
      %p125 = pneg %p124
    $region22: #{image_tokenizer.1} parent=5 // pred_check_branch
      %127 = sbr.rel (%p125) target = $region24
    $region23: #{image_tokenizer.1} parent=5 // pred_region
      // Predicated region
      $region25: #{image_tokenizer.1} parent=23 // pred_check
        %p128 = pneg %p29
      $region26: #{image_tokenizer.1} parent=23 // pred_check_branch
        %130 = sbr.rel (%p128) target = $region28
      $region27: #{image_tokenizer.1} parent=23 // pred_region
        %p131 = scmp.lt.s32.totalorder %s9, 1
        %s132 = scalar_select %p131, %s9, 1
        %s133 = smul.addr %s132, 3
        %s134 = smul.addr %s133, 4
        %s135 = scalar_lea.vmem %s0, %s134
      $region28: #{image_tokenizer.1} parent=23 // pred_fallthru
        _
    $region24: #{image_tokenizer.1} parent=5 // pred_fallthru
      _
    %p136 = scmp.le.s32.totalorder 1, %s9
    %p137 = scmp.lt.s32.totalorder %s9, 3
    %p138 = pnand %p136, %p137
    %p139 = pneg %p138
    // Predicated region
    $region29: #{image_tokenizer.1} parent=5 // pred_check
      _
    $region30: #{image_tokenizer.1} parent=5 // pred_check_branch
      %141 = sbr.rel (%p138) target = $region32
    $region31: #{image_tokenizer.1} parent=5 // pred_region
      %s142 = ssub.s32 %s9, 1
      %p143 = scmp.lt.s32.totalorder %s14, 1
      %s144 = scalar_select %p143, %s14, 1
      %s145 = smul.addr %s144, 3
      %s146 = smul.addr %s145, 4
      %s147 = scalar_lea.vmem %s0, %s146
      %p148 = pneg %p35
      %p149 = pneg %p32
      %p150 = pneg %p56
      %p151 = pneg %p53
      %p152 = pneg %p77
      %p153 = pneg %p74
      %p154 = pneg %p103
      %p155 = pneg %p100
      %p156 = scmp.lt.s32.totalorder %s14, 1
      %s157 = scalar_select %p156, %s14, 1
      %s158 = smul.addr %s157, 3
      %s159 = smul.addr %s158, 8
      %s160 = scalar_lea.vmem %s3, %s159
      %p161 = scmp.lt.s32.totalorder %s14, 1
      %s162 = scalar_select %p161, %s14, 1
      %s163 = smul.addr %s162, 3
      %s164 = smul.addr %s163, 4
      %s165 = scalar_lea.vmem %s0, %s164
      %p166 = scmp.lt.s32.totalorder %s14, 1
      %s167 = scalar_select %p166, %s14, 1
      %s168 = smul.addr %s167, 3
      %s169 = smul.addr %s168, 8
      %s170 = scalar_lea.vmem %s3, %s169
      %v172 = vld [vmem:[%s165] sm:$0xf]
      %v173 = vld [vmem:[%s165 + $0x4] sm:$0xf]
      %v174 = vld [vmem:[%s165 + $0x8] sm:$0xf]
      %v175 = vld [vmem:[%s1] sm:$0xf]
      %v176 = vld [vmem:[%s1 + $0x4] sm:$0xf]
      %v177 = vld [vmem:[%s1 + $0x8] sm:$0xf]
      %v178 = vld [vmem:[%s1 + $0xc] sm:$0xf]
      %v179 = vld [vmem:[%s1 + $0x10] sm:$0xf]
      %v180 = vld [vmem:[%s1 + $0x14] sm:$0xf]
      %v181 = vld [vmem:[%s1 + $0x18] sm:$0xf]
      %v182 = vld [vmem:[%s1 + $0x1c] sm:$0xf]
      %v183 = vld [vmem:[%s1 + $0x20] sm:$0xf]
      %v184 = vld [vmem:[%s1 + $0x24] sm:$0xf]
      %v185 = vld [vmem:[%s1 + $0x28] sm:$0xf]
      %v186 = vld [vmem:[%s1 + $0x2c] sm:$0xf]
      %v187 = vld [vmem:[%s1 + $0x30] sm:$0xf]
      %v188 = vld [vmem:[%s1 + $0x34] sm:$0xf]
      %v189 = vld [vmem:[%s1 + $0x38] sm:$0xf]
      %v190 = vld [vmem:[%s1 + $0x3c] sm:$0xf]
      %v194 = vunpack.c.l.b16 %v172
      %v195 = vunpack.c.l.b16 %v173
      %v196 = vunpack.c.l.b16 %v174
      %v197 = vpack.c.b16 %v195, %v194
      %v198 = vpack.c.b16 %v196, %v196
      %v217 = vunpack.c.l.b16 %v175
      %v218 = vunpack.c.l.b16 %v176
      %v219 = vunpack.c.l.b16 %v177
      %v220 = vunpack.c.l.b16 %v178
      %v221 = vunpack.c.l.b16 %v179
      %v222 = vunpack.c.l.b16 %v180
      %v223 = vunpack.c.l.b16 %v181
      %v224 = vunpack.c.l.b16 %v182
      %v225 = vunpack.c.l.b16 %v183
      %v226 = vunpack.c.l.b16 %v184
      %v227 = vunpack.c.l.b16 %v185
      %v228 = vunpack.c.l.b16 %v186
      %v229 = vunpack.c.l.b16 %v187
      %v230 = vunpack.c.l.b16 %v188
      %v231 = vunpack.c.l.b16 %v189
      %v232 = vunpack.c.l.b16 %v190
      %v233 = vpack.c.b16 %v218, %v217
      %v234 = vpack.c.b16 %v220, %v219
      %v235 = vpack.c.b16 %v222, %v221
      %v236 = vpack.c.b16 %v224, %v223
      %v237 = vpack.c.b16 %v226, %v225
      %v238 = vpack.c.b16 %v228, %v227
      %v239 = vpack.c.b16 %v230, %v229
      %v240 = vpack.c.b16 %v232, %v231
      %249 = vmatprep.subr.bf16.mxu0 0
      %250 = vmatpush1.bf16.msra.mxu0 %v233
      %251 = vmatprep.subr.bf16.mxu0 0
      %252 = vmatpush1.bf16.msra.mxu0 %v234
      %253 = vmatprep.subr.bf16.mxu0 0
      %254 = vmatpush1.bf16.msra.mxu0 %v235
      %255 = vmatprep.subr.bf16.mxu0 0
      %256 = vmatpush1.bf16.msra.mxu0 %v236
      %257 = vmatprep.subr.bf16.mxu0 0
      %258 = vmatpush1.bf16.msra.mxu0 %v237
      %259 = vmatprep.subr.bf16.mxu0 0
      %260 = vmatpush1.bf16.msra.mxu0 %v238
      %261 = vmatprep.subr.bf16.mxu0 0
      %262 = vmatpush1.bf16.msra.mxu0 %v239
      %263 = vmatprep.subr.bf16.mxu0 0
      %264 = vmatpush1.bf16.msra.mxu0 %v240
      %265 = vmatprep.subr.bf16.mxu0 0
      %266 = vmatpush1.bf16.msra.mxu0 0
      %267 = vmatprep.subr.bf16.mxu0 0
      %268 = vmatpush1.bf16.msra.mxu0 0
      %269 = vmatprep.subr.bf16.mxu0 0
      %270 = vmatpush1.bf16.msra.mxu0 0
      %271 = vmatprep.subr.bf16.mxu0 0
      %272 = vmatpush1.bf16.msra.mxu0 0
      %273 = vmatprep.subr.bf16.mxu0 0
      %274 = vmatpush1.bf16.msra.mxu0 0
      %275 = vmatprep.subr.bf16.mxu0 0
      %276 = vmatpush1.bf16.msra.mxu0 0
      %277 = vmatprep.subr.bf16.mxu0 0
      %278 = vmatpush1.bf16.msra.mxu0 0
      %279 = vmatprep.subr.bf16.mxu0 0
      %280 = vmatpush1.bf16.msra.mxu0 0
      %281 = vmatprep.mubr.bf16.mxu0 0
      %282 = vmatmul.mubr.bf16.gmra.mrb[0].mxu0 %v197
      %v283 = vpop.f32.mrb[0].mxu0
      %v284 = vadd.f32 0.0, %v283
      %v285 = vpop.f32.mrb[0].mxu0
      %v286 = vpop.f32.mrb[0].mxu0
      %v287 = vadd.f32 0.0, %v286
      %v288 = vpop.f32.mrb[0].mxu0
      %289 = vmatprep.mubr.bf16.mxu0 0
      %290 = vmatmul.mubr.bf16.gmra.mrb[0].mxu0 %v198
      %v291 = vpop.f32.mrb[0].mxu0
      %v292 = vadd.f32 0.0, %v291
      %v293 = vpop.f32.mrb[0].mxu0
      %v294 = vpop.f32.mrb[0].mxu0
      %v295 = vpop.f32.mrb[0].mxu0
      %296 = vdwg.mxu0
      %v297 = vld [vmem:[%s2] sm:$0xff]
      %v298 = vld [vmem:[%s2 + $0x8] sm:$0xff]
      %v299 = vld [vmem:[%s2 + $0x10] sm:$0xff]
      %v300 = vadd.f32 %v284, %v297
      %v301 = vadd.f32 %v287, %v298
      %v302 = vadd.f32 %v292, %v299
      %303 = vst [vmem:[%s170] sm:$0xff] %v300
      %304 = vst [vmem:[%s170 + $0x8] sm:$0xff] %v301
      %305 = vst [vmem:[%s170 + $0x10] sm:$0xff] %v302
      %p306 = scmp.lt.s32.totalorder %s14, 1
      %s307 = scalar_select %p306, %s14, 1
      %s308 = smul.addr %s307, 3
      %s309 = smul.addr %s308, 8
      %s310 = scalar_lea.vmem %s3, %s309
      // Predicated region
      $region33: #{image_tokenizer.1} parent=31 // pred_check
        %p311 = pneg %p100
      $region34: #{image_tokenizer.1} parent=31 // pred_check_branch
        %313 = sbr.rel (%p311) target = $region36
      $region35: #{image_tokenizer.1} parent=31 // pred_region
        _
      $region36: #{image_tokenizer.1} parent=31 // pred_fallthru
        _
    $region32: #{image_tokenizer.1} parent=5 // pred_fallthru
      _
    %p314 = scmp.le.s32.totalorder 2, %s9
    // Predicated region
    $region37: #{image_tokenizer.1} parent=5 // pred_check
      %p315 = pneg %p314
    $region38: #{image_tokenizer.1} parent=5 // pred_check_branch
      %317 = sbr.rel (%p315) target = $region40
    $region39: #{image_tokenizer.1} parent=5 // pred_region
      %s318 = ssub.s32 %s9, 2
      // Predicated region
      $region41: #{image_tokenizer.1} parent=39 // pred_check
        %p319 = pneg %p106
      $region42: #{image_tokenizer.1} parent=39 // pred_check_branch
        %321 = sbr.rel (%p319) target = $region44
      $region43: #{image_tokenizer.1} parent=39 // pred_region
        %p322 = scmp.lt.s32.totalorder %s15, 1
        %s323 = scalar_select %p322, %s15, 1
        %s324 = smul.addr %s323, 3
        %s325 = smul.addr %s324, 8
        %s326 = scalar_lea.vmem %s3, %s325
      $region44: #{image_tokenizer.1} parent=39 // pred_fallthru
        _
    $region40: #{image_tokenizer.1} parent=5 // pred_fallthru
      _
  $region6: #{image_tokenizer.1} parent=0 // loop_footer
    %s13 = sadd.s32 1, %s9
  $region7: #{image_tokenizer.1} parent=0 // loop_footer_branch
    %8 = sbr.rel target = $region3
  $region8: #{image_tokenizer.1} parent=0 // loop_exit
    _

</llo_original>
